<compile_context>
chip_gen: v6e
topology: v6e:2x2x1
jax: 0.10.0
libtpu: 0.0.40
codegen_flags: <defaults>
</compile_context>

<pallas_src>
import numpy as np
import jax
import jax.numpy as jnp
from jax.experimental import pallas as pl
from jax.experimental.pallas import tpu as pltpu


# ----------------------------------------------------------------------------
# Pallas kernel: tiled matmul (MXU) + bias, accumulator over the contraction
# ----------------------------------------------------------------------------
def dendriter_kernel(x_ref, a_ref, b_ref, o_ref, acc_ref):
    # x_ref : (D, tk)   cumulative-replicated input slab
    # a_ref : (tk, tu)  folded selection * dendriticW * kernel
    # b_ref : (D, tu)   folded bias table
    # o_ref : (D, tu)   output tile (lane-dense)
    # acc_ref: (D, tu)  f32 accumulator scratch
    k = pl.program_id(1)

    @pl.when(k == 0)
    def _():
        acc_ref[...] = jnp.zeros_like(acc_ref)

    acc_ref[...] += jnp.dot(x_ref[...], a_ref[...],
                            preferred_element_type=jnp.float32)

    @pl.when(k == pl.num_programs(1) - 1)
    def _():
        o_ref[...] = (acc_ref[...] + b_ref[...]).astype(o_ref.dtype)


def _round_up(a, m):
    return ((a + m - 1) // m) * m


def dendriter_forward(x, dend, kernel, bias, dW, dB, *, tu=128):
    """x: (D, C) f32; dend: (D, S, U) int32; kernel/bias/dB: (1, U); dW: (S, U).

    Returns (D, U) f32, matching the PyTorch forward.
    tu: units tile (lane) width; 128 everywhere, 256 also fine on v6e/v7x.
    """
    D, C = x.shape
    Dd, S, U = dend.shape
    assert Dd == D, "gather consumes the first dendrite_size rows of x"
    f32 = jnp.float32
    x = x.astype(f32)

    # --- static parameter folds (in a real deployment: precomputed once) ----
    onehot = (dend[:, :, :, None] ==
              jnp.arange(C, dtype=dend.dtype)[None, None, None, :]).astype(f32)
    # A[d, c, u] = kernel[u] * sum_j onehot[d, j, u, c] * dW[j, u]
    A = jnp.einsum('dsuc,su->dcu', onehot, dW.astype(f32)) \
        * kernel[0].astype(f32)[None, None, :]
    a_flat = A.reshape(D * C, U)                                    # (D*C, U)
    wsum = jnp.sum(dW.astype(f32), axis=0)                          # (U,)
    bias_full = (jnp.arange(1, D + 1, dtype=f32)[:, None]
                 * (bias[0].astype(f32) * wsum)[None, :]
                 + float(S) * dB[0].astype(f32)[None, :])           # (D, U)

    # --- cumulative block replication of x (folds cumsum into the matmul) ---
    tri = (jnp.arange(D)[:, None] >= jnp.arange(D)[None, :]).astype(f32)  # (D, D)
    xcs = (tri[:, :, None] * x[None, :, :]).reshape(D, D * C)            # (D, D*C)

    # --- lane-dense padding + contraction tiling -----------------------------
    DC = D * C
    U_pad = _round_up(U, tu)
    if DC <= 512:
        tk = _round_up(DC, 128)
        DC_pad = tk
    else:
        tk = 512
        DC_pad = _round_up(DC, tk)

    xcs_p = jnp.pad(xcs, ((0, 0), (0, DC_pad - DC)))
    a_p = jnp.pad(a_flat, ((0, DC_pad - DC), (0, U_pad - U)))
    b_p = jnp.pad(bias_full, ((0, 0), (0, U_pad - U)))

    grid = (U_pad // tu, DC_pad // tk)   # (units tiles, contraction tiles)

    out = pl.pallas_call(
        dendriter_kernel,
        out_shape=jax.ShapeDtypeStruct((D, U_pad), f32),
        grid_spec=pltpu.PrefetchScalarGridSpec(
            num_scalar_prefetch=0,
            grid=grid,
            in_specs=[
                pl.BlockSpec((D, tk), lambda u, k: (0, k)),   # xcs
                pl.BlockSpec((tk, tu), lambda u, k: (k, u)),  # folded weights
                pl.BlockSpec((D, tu), lambda u, k: (0, u)),   # folded bias
            ],
            out_specs=pl.BlockSpec((D, tu), lambda u, k: (0, u)),
            scratch_shapes=[pltpu.VMEM((D, tu), jnp.float32)],
        ),
        compiler_params=pltpu.CompilerParams(
            # units axis parallel (2 TCs on v7x), contraction axis arbitrary.
            dimension_semantics=("parallel", "arbitrary")),
    )(xcs_p, a_p, b_p)

    return out[:, :U]


# ----------------------------------------------------------------------------
# Glue: deterministic dendrite-table construction (mirrors dendriter.segmenter)
# ----------------------------------------------------------------------------
def build_dendrites(units, dendrite_size, connections, seed=0):
    rng = np.random.RandomState(seed)
    assert connections % dendrite_size == 0, "partial connections unsupported"
    seql = connections // dendrite_size
    tuples = []
    for _ in range(units):
        perm = rng.permutation(connections)
        tuples.append([perm[dendrite_size * j: dendrite_size * (j + 1)]
                       for j in range(seql)])
    dend = np.asarray(tuples, dtype=np.int32)              # (units, seql, dsz)
    dend = np.transpose(dend, (2, 1, 0))                   # (dsz, seql, units)
    return dend, seql


def ref_forward(x, dend, kernel, bias, dW, dB):
    """Pure-JAX reference of the PyTorch forward (for verification)."""
    out = x[:, :, None] * kernel[0][None, None, :] + bias[0][None, None, :]
    D, S, U = dend.shape
    ii = jnp.arange(D)[:, None, None]
    uu = jnp.arange(U)[None, None, :]
    gathered = out[ii, dend, uu]                           # (D, S, U)
    cs = jnp.cumsum(gathered, axis=0)
    y = cs * dW[None, :, :] + dB[0][None, None, :]
    return jnp.sum(y, axis=1)


if __name__ == "__main__":
    # Small shapes consistent with the module.
    units = 8
    dendrite_size = 4
    connections = 16          # input_shape[-1]
    batch = dendrite_size     # gather consumes the first dendrite_size rows

    dend_np, seql = build_dendrites(units, dendrite_size, connections, seed=0)
    dend = jnp.asarray(dend_np)                            # (D, S, U) int32

    key = jax.random.PRNGKey(0)
    kx, kk, kb, kdw, kdb = jax.random.split(key, 5)

    x = jax.random.normal(kx, (batch, connections), dtype=jnp.float32)

    # Deterministic "kaiming-style" normal inits (synthetic weights).
    kernel = jax.random.normal(kk, (1, units), dtype=jnp.float32) * np.sqrt(2.0)
    bias = jax.random.normal(kb, (1, units), dtype=jnp.float32) * np.sqrt(2.0 / units)
    dW = jax.random.normal(kdw, (seql, units), dtype=jnp.float32) * np.sqrt(2.0 / units)
    dB = jax.random.normal(kdb, (1, units), dtype=jnp.float32) * np.sqrt(2.0 / units)

    out = dendriter_forward(x, dend, kernel, bias, dW, dB)
    out = jax.block_until_ready(out)

    ref = ref_forward(x, dend, kernel, bias, dW, dB)
    np.testing.assert_allclose(np.asarray(out), np.asarray(ref),
                               rtol=1e-4, atol=1e-4)

    print("KERNEL_OK")
</pallas_src>

<mosaic_0001>
module attributes {stable_mosaic.version = 11 : i64} {
  func.func @dendriter_kernel(%arg0: i32, %arg1: i32, %arg2: memref<4x128xf32, #tpu.memory_space<vmem>>, %arg3: memref<128x128xf32, #tpu.memory_space<vmem>>, %arg4: memref<4x128xf32, #tpu.memory_space<vmem>>, %arg5: memref<4x128xf32, #tpu.memory_space<vmem>>, %arg6: memref<4x128xf32, #tpu.memory_space<vmem>>) attributes {dimension_semantics = [#tpu.dimension_semantics<parallel>, #tpu.dimension_semantics<arbitrary>], iteration_bounds = array<i64: 1, 1>, scalar_prefetch = 0 : i64, scratch_operands = 1 : i64, tpu.core_type = #tpu.core_type<tc>, window_params = [{transform_indices = @transform_0, window_bounds = array<i64: 4, 128>}, {transform_indices = @transform_1, window_bounds = array<i64: 128, 128>}, {transform_indices = @transform_2, window_bounds = array<i64: 4, 128>}, {transform_indices = @transform_3, window_bounds = array<i64: 4, 128>}]} {
    %c0_i32 = arith.constant 0 : i32
    %0 = arith.cmpi eq, %arg1, %c0_i32 : i32
    %1 = arith.extui %0 : i1 to i32
    %c0_i32_0 = arith.constant 0 : i32
    %2 = arith.cmpi ne, %1, %c0_i32_0 : i32
    scf.if %2 {
      %cst_10 = arith.constant 0.000000e+00 : f32
      %12 = vector.broadcast %cst_10 : f32 to vector<4x128xf32>
      %c0_11 = arith.constant 0 : index
      %c0_12 = arith.constant 0 : index
      %13 = vector.load %arg6[%c0_11, %c0_12] : memref<4x128xf32, #tpu.memory_space<vmem>>, vector<4x128xf32>
      tpu.vector_store %arg6[%c0_11, %c0_12], %12 {strides = array<i32>} : memref<4x128xf32, #tpu.memory_space<vmem>>, vector<4x128xf32>,
    } else {
    }
    %c0 = arith.constant 0 : index
    %c0_1 = arith.constant 0 : index
    %3 = vector.load %arg6[%c0, %c0_1] : memref<4x128xf32, #tpu.memory_space<vmem>>, vector<4x128xf32>
    %c0_2 = arith.constant 0 : index
    %c0_3 = arith.constant 0 : index
    %4 = vector.load %arg2[%c0_2, %c0_3] : memref<4x128xf32, #tpu.memory_space<vmem>>, vector<4x128xf32>
    %c0_4 = arith.constant 0 : index
    %c0_5 = arith.constant 0 : index
    %5 = vector.load %arg3[%c0_4, %c0_5] : memref<128x128xf32, #tpu.memory_space<vmem>>, vector<128x128xf32>
    %cst = arith.constant dense<0.000000e+00> : vector<4x128xf32>
    %6 = tpu.matmul %4, %5, %cst {dimension_numbers = #tpu.dot_dimension_numbers<[1], [0], [0], [1], [0, 0, 1, 1], [], []>} : vector<4x128xf32>, vector<128x128xf32>, vector<4x128xf32> -> vector<4x128xf32>
    %7 = arith.addf %3, %6 : vector<4x128xf32>
    %c0_6 = arith.constant 0 : index
    %c0_7 = arith.constant 0 : index
    %8 = vector.load %arg6[%c0_6, %c0_7] : memref<4x128xf32, #tpu.memory_space<vmem>>, vector<4x128xf32>
    tpu.vector_store %arg6[%c0_6, %c0_7], %7 {strides = array<i32>} : memref<4x128xf32, #tpu.memory_space<vmem>>, vector<4x128xf32>,
    %c0_i32_8 = arith.constant 0 : i32
    %9 = arith.cmpi eq, %arg1, %c0_i32_8 : i32
    %10 = arith.extui %9 : i1 to i32
    %c0_i32_9 = arith.constant 0 : i32
    %11 = arith.cmpi ne, %10, %c0_i32_9 : i32
    scf.if %11 {
      %c0_10 = arith.constant 0 : index
      %c0_11 = arith.constant 0 : index
      %12 = vector.load %arg6[%c0_10, %c0_11] : memref<4x128xf32, #tpu.memory_space<vmem>>, vector<4x128xf32>
      %c0_12 = arith.constant 0 : index
      %c0_13 = arith.constant 0 : index
      %13 = vector.load %arg4[%c0_12, %c0_13] : memref<4x128xf32, #tpu.memory_space<vmem>>, vector<4x128xf32>
      %14 = arith.addf %12, %13 : vector<4x128xf32>
      %c0_14 = arith.constant 0 : index
      %c0_15 = arith.constant 0 : index
      %15 = vector.load %arg5[%c0_14, %c0_15] : memref<4x128xf32, #tpu.memory_space<vmem>>, vector<4x128xf32>
      tpu.vector_store %arg5[%c0_14, %c0_15], %14 {strides = array<i32>} : memref<4x128xf32, #tpu.memory_space<vmem>>, vector<4x128xf32>,
    } else {
    }
    return
  }
  func.func @transform_0(%arg0: i32, %arg1: i32) -> (i32, i32) {
    %c0_i32 = arith.constant 0 : i32
    %c0_i32_0 = arith.constant 0 : i32
    return %c0_i32, %arg1 : i32, i32
  }
  func.func @transform_1(%arg0: i32, %arg1: i32) -> (i32, i32) {
    %c0_i32 = arith.constant 0 : i32
    return %arg1, %arg0 : i32, i32
  }
  func.func @transform_2(%arg0: i32, %arg1: i32) -> (i32, i32) {
    %c0_i32 = arith.constant 0 : i32
    %c0_i32_0 = arith.constant 0 : i32
    return %c0_i32, %arg0 : i32, i32
  }
  func.func @transform_3(%arg0: i32, %arg1: i32) -> (i32, i32) {
    %c0_i32 = arith.constant 0 : i32
    %c0_i32_0 = arith.constant 0 : i32
    return %c0_i32, %arg0 : i32, i32
  }
}

</mosaic_0001>

<llo_original>
// kernel: tpu_custom_call.1
$region0: #{tpu_custom_call.1}
  #allocation0 [shape = 'u32[]', space=smem, size = 0x4, offset = 0x4, fixed_abs, tag = 'smem constant byte address 0x4 - core index']
  #allocation1 [shape = 'u32[144,128]{1,0:T(1,128)}', space=vmem, size = 0x12000, scoped, tag = 'internal scratch']
  #allocation2 [shape = 'f32[4,128]{1,0:T(4,128)}', space=vmem, size = 0x800, scoped, tag = 'scratch operand']
  %s0 = inlined_call_operand.hbm [shape: f32[4,128], index: 0, kind: input, shape index: {}]
  %s1 = inlined_call_operand.hbm [shape: f32[128,128], index: 1, kind: input, shape index: {}]
  %s2 = inlined_call_operand.hbm [shape: f32[4,128], index: 2, kind: input, shape index: {}]
  %s3 = inlined_call_operand.hbm [shape: f32[4,128], index: 3, kind: output, shape index: {}]
  %s4 = sld [smem:[#allocation0]]
  $region42: #{tpu_custom_call.1} parent=0
    _
  %s6 = ssub.s32 1, %s4
  %s7 = scalar_select 0, %s6, %s4
  $region1: #{tpu_custom_call.1} parent=0
    #allocation3 [shape = 'u8[2048]{0}', space=vmem, size = 0x800, scoped, tag = 'input window, operand 0, single buffered']
    #allocation4 [shape = 's32[1]{0}', space=sflag, size = 0x4, scoped, tag = 'scoped memory for tpu_custom_call.1']
    #allocation5 [shape = 's32[1]{0}', space=sflag, size = 0x4, scoped, tag = 'scoped memory for tpu_custom_call.1']
    #allocation6 [shape = 'u8[65536]{0}', space=vmem, size = 0x10000, scoped, tag = 'input window, operand 1, single buffered']
    #allocation7 [shape = 's32[1]{0}', space=sflag, size = 0x4, scoped, tag = 'scoped memory for tpu_custom_call.1']
    #allocation8 [shape = 'u8[2048]{0}', space=vmem, size = 0x800, scoped, tag = 'input window, operand 2, single buffered']
    #allocation9 [shape = 'u8[2048]{0}', space=vmem, size = 0x800, scoped, tag = 'output window, operand 0, single buffered']
    %8 = vsyncpa [#allocation4], 0
    %9 = vsyncpa [#allocation7], 0
    %10 = vsyncpa [#allocation5], 0
    // Predicated region
    $region2: #{tpu_custom_call.1} parent=1 // pred_check
      _
    $region3: #{tpu_custom_call.1} parent=1 // pred_check_branch
      %12 = sbr.rel (0) target = $region5
    $region4: #{tpu_custom_call.1} parent=1 // pred_region
      %s14 = ssub.s32 64, 64
      %15 = vsyncadd [#allocation4], %s14
      %s17 = sshll.u32 [#allocation3], 4
      %s18 = int_to_ptr.vmem [resolvable:$true] %s17
      %20 = dma.hbm_to_vmem [thread:$0]  %s0, 64, %s18, [#allocation4]
    $region5: #{tpu_custom_call.1} parent=1 // pred_fallthru
      _
    // Predicated region
    $region6: #{tpu_custom_call.1} parent=1 // pred_check
      _
    $region7: #{tpu_custom_call.1} parent=1 // pred_check_branch
      %22 = sbr.rel (0) target = $region9
    $region8: #{tpu_custom_call.1} parent=1 // pred_region
      %s24 = ssub.s32 2048, 2048
      %25 = vsyncadd [#allocation7], %s24
      %s26 = sshll.u32 [#allocation6], 4
      %s27 = int_to_ptr.vmem [resolvable:$true] %s26
      %32 = dma.hbm_to_vmem [thread:$0]  %s1, 2048, %s27, [#allocation7], 128, 128, 8
    $region9: #{tpu_custom_call.1} parent=1 // pred_fallthru
      _
    // Predicated region
    $region10: #{tpu_custom_call.1} parent=1 // pred_check
      _
    $region11: #{tpu_custom_call.1} parent=1 // pred_check_branch
      %34 = sbr.rel (0) target = $region13
    $region12: #{tpu_custom_call.1} parent=1 // pred_region
      %s36 = ssub.s32 64, 64
      %37 = vsyncadd [#allocation7], %s36
      %s39 = sshll.u32 [#allocation8], 4
      %s40 = int_to_ptr.vmem [resolvable:$true] %s39
      %42 = dma.hbm_to_vmem [thread:$0]  %s2, 64, %s40, [#allocation7]
    $region13: #{tpu_custom_call.1} parent=1 // pred_fallthru
      _
    // Predicated region
    $region14: #{tpu_custom_call.1} parent=1 // pred_check
      _
    $region15: #{tpu_custom_call.1} parent=1 // pred_check_branch
      %44 = sbr.rel (0) target = $region17
    $region16: #{tpu_custom_call.1} parent=1 // pred_region
      %45 = dma.done [#allocation4], 64
    $region17: #{tpu_custom_call.1} parent=1 // pred_fallthru
      _
    // Predicated region
    $region18: #{tpu_custom_call.1} parent=1 // pred_check
      _
    $region19: #{tpu_custom_call.1} parent=1 // pred_check_branch
      %47 = sbr.rel (0) target = $region21
    $region20: #{tpu_custom_call.1} parent=1 // pred_region
      %48 = dma.done [#allocation7], 2048
    $region21: #{tpu_custom_call.1} parent=1 // pred_fallthru
      _
    // Predicated region
    $region22: #{tpu_custom_call.1} parent=1 // pred_check
      _
    $region23: #{tpu_custom_call.1} parent=1 // pred_check_branch
      %50 = sbr.rel (0) target = $region25
    $region24: #{tpu_custom_call.1} parent=1 // pred_region
      %51 = dma.done [#allocation7], 64
    $region25: #{tpu_custom_call.1} parent=1 // pred_fallthru
      _
    %p52 = scmp.eq.s32.totalorder 0, 0
    // Predicated region
    $region26: #{tpu_custom_call.1} parent=1 // pred_check
      %p53 = pneg %p52
    $region27: #{tpu_custom_call.1} parent=1 // pred_check_branch
      %55 = sbr.rel (%p53) target = $region29
    $region28: #{tpu_custom_call.1} parent=1 // pred_region
      %56 = vst [vmem:[#allocation2] sm:$0xf] 0.0
    $region29: #{tpu_custom_call.1} parent=1 // pred_fallthru
      _
    %v57 = vld [vmem:[#allocation2] sm:$0xf]
    %v58 = vld [vmem:[#allocation3] sm:$0xf]
    %v59 = vld [vmem:[#allocation6] sm:$0xff]
    %v60 = vld [vmem:[#allocation6 + $0x8] sm:$0xff]
    %v61 = vld [vmem:[#allocation6 + $0x10] sm:$0xff]
    %v62 = vld [vmem:[#allocation6 + $0x18] sm:$0xff]
    %v63 = vld [vmem:[#allocation6 + $0x20] sm:$0xff]
    %v64 = vld [vmem:[#allocation6 + $0x28] sm:$0xff]
    %v65 = vld [vmem:[#allocation6 + $0x30] sm:$0xff]
    %v66 = vld [vmem:[#allocation6 + $0x38] sm:$0xff]
    %v67 = vld [vmem:[#allocation6 + $0x40] sm:$0xff]
    %v68 = vld [vmem:[#allocation6 + $0x48] sm:$0xff]
    %v69 = vld [vmem:[#allocation6 + $0x50] sm:$0xff]
    %v70 = vld [vmem:[#allocation6 + $0x58] sm:$0xff]
    %v71 = vld [vmem:[#allocation6 + $0x60] sm:$0xff]
    %v72 = vld [vmem:[#allocation6 + $0x68] sm:$0xff]
    %v73 = vld [vmem:[#allocation6 + $0x70] sm:$0xff]
    %v74 = vld [vmem:[#allocation6 + $0x78] sm:$0xff]
    %75 = vmatprep.subr.mxu0 0.0
    %76 = vmatpush1.msra.mxu0 %v74
    %77 = vmatprep.subr.mxu0 0.0
    %78 = vmatpush1.msra.mxu0 %v73
    %79 = vmatprep.subr.mxu0 0.0
    %80 = vmatpush1.msra.mxu0 %v72
    %81 = vmatprep.subr.mxu0 0.0
    %82 = vmatpush1.msra.mxu0 %v71
    %83 = vmatprep.subr.mxu0 0.0
    %84 = vmatpush1.msra.mxu0 %v70
    %85 = vmatprep.subr.mxu0 0.0
    %86 = vmatpush1.msra.mxu0 %v69
    %87 = vmatprep.subr.mxu0 0.0
    %88 = vmatpush1.msra.mxu0 %v68
    %89 = vmatprep.subr.mxu0 0.0
    %90 = vmatpush1.msra.mxu0 %v67
    %91 = vmatprep.subr.mxu0 0.0
    %92 = vmatpush1.msra.mxu0 %v66
    %93 = vmatprep.subr.mxu0 0.0
    %94 = vmatpush1.msra.mxu0 %v65
    %95 = vmatprep.subr.mxu0 0.0
    %96 = vmatpush1.msra.mxu0 %v64
    %97 = vmatprep.subr.mxu0 0.0
    %98 = vmatpush1.msra.mxu0 %v63
    %99 = vmatprep.subr.mxu0 0.0
    %100 = vmatpush1.msra.mxu0 %v62
    %101 = vmatprep.subr.mxu0 0.0
    %102 = vmatpush1.msra.mxu0 %v61
    %103 = vmatprep.subr.mxu0 0.0
    %104 = vmatpush1.msra.mxu0 %v60
    %105 = vmatprep.subr.mxu0 0.0
    %106 = vmatpush1.msra.mxu0 %v59
    %107 = vmatprep.subr.mxu0 0.0
    %108 = vmatpush2.msra.mxu0 0.0
    %109 = vmatprep.subr.mxu0 0.0
    %110 = vmatpush2.msra.mxu0 0.0
    %111 = vmatprep.subr.mxu0 0.0
    %112 = vmatpush2.msra.mxu0 0.0
    %113 = vmatprep.subr.mxu0 0.0
    %114 = vmatpush2.msra.mxu0 0.0
    %115 = vmatprep.subr.mxu0 0.0
    %116 = vmatpush2.msra.mxu0 0.0
    %117 = vmatprep.subr.mxu0 0.0
    %118 = vmatpush2.msra.mxu0 0.0
    %119 = vmatprep.subr.mxu0 0.0
    %120 = vmatpush2.msra.mxu0 0.0
    %121 = vmatprep.subr.mxu0 0.0
    %122 = vmatpush2.msra.mxu0 0.0
    %123 = vmatprep.subr.mxu0 0.0
    %124 = vmatpush2.msra.mxu0 0.0
    %125 = vmatprep.subr.mxu0 0.0
    %126 = vmatpush2.msra.mxu0 0.0
    %127 = vmatprep.subr.mxu0 0.0
    %128 = vmatpush2.msra.mxu0 0.0
    %129 = vmatprep.subr.mxu0 0.0
    %130 = vmatpush2.msra.mxu0 0.0
    %131 = vmatprep.subr.mxu0 0.0
    %132 = vmatpush2.msra.mxu0 0.0
    %133 = vmatprep.subr.mxu0 0.0
    %134 = vmatpush2.msra.mxu0 0.0
    %135 = vmatprep.subr.mxu0 0.0
    %136 = vmatpush2.msra.mxu0 0.0
    %137 = vmatprep.subr.mxu0 0.0
    %138 = vmatpush2.msra.mxu0 0.0
    %139 = vmatprep.mubr.f32.mxu0 0.0
    %140 = vmatmul.mubr.f32.gmra.mxu0 %v58
    %v141 = vpop.f32.mrf.mxu0
    %v142 = vadd.f32 0.0, %v141
    %v143 = vpop.f32.mrf.mxu0
    %144 = vdwg.mxu0
    %v145 = vadd.f32 %v57, %v142
    %146 = vst [vmem:[#allocation2] sm:$0xf] %v145
    // Predicated region
    $region30: #{tpu_custom_call.1} parent=1 // pred_check
      %p147 = pneg %p52
    $region31: #{tpu_custom_call.1} parent=1 // pred_check_branch
      %149 = sbr.rel (%p147) target = $region33
    $region32: #{tpu_custom_call.1} parent=1 // pred_region
      %v150 = vld [vmem:[#allocation2] sm:$0xf]
      %v151 = vld [vmem:[#allocation8] sm:$0xf]
      %v152 = vadd.f32 %v150, %v151
      %153 = vst [vmem:[#allocation9] sm:$0xf] %v152
    $region33: #{tpu_custom_call.1} parent=1 // pred_fallthru
      _
    // Predicated region
    $region34: #{tpu_custom_call.1} parent=1 // pred_check
      _
    $region35: #{tpu_custom_call.1} parent=1 // pred_check_branch
      %155 = sbr.rel (0) target = $region37
    $region36: #{tpu_custom_call.1} parent=1 // pred_region
      %s157 = ssub.s32 64, 64
      %158 = vsyncadd [#allocation5], %s157
      %s160 = sshll.u32 [#allocation9], 4
      %s161 = int_to_ptr.vmem [resolvable:$true] %s160
      %163 = dma.vmem_to_hbm [thread:$0]  %s161, 64, %s3, [#allocation5]
    $region37: #{tpu_custom_call.1} parent=1 // pred_fallthru
      _
    // Predicated region
    $region38: #{tpu_custom_call.1} parent=1 // pred_check
      _
    $region39: #{tpu_custom_call.1} parent=1 // pred_check_branch
      %165 = sbr.rel (0) target = $region41
    $region40: #{tpu_custom_call.1} parent=1 // pred_region
      %166 = dma.done [#allocation5], 64
    $region41: #{tpu_custom_call.1} parent=1 // pred_fallthru
      _
    %167 = vsyncpa [#allocation4], 1
    %168 = vsyncpa [#allocation7], 1
    %169 = vsyncpa [#allocation5], 1

</llo_original>
